<compile_context>
chip_gen: v6e
topology: v6e:2x2x1
jax: 0.10.0
libtpu: 0.0.40
codegen_flags: <defaults>
</compile_context>

<pallas_src>
from functools import partial

import jax
import jax.numpy as jnp
import numpy as np
from jax.experimental import pallas as pl
from jax.experimental.pallas import tpu as pltpu

LANE = 128
MIB = 2 ** 20


# --------------------------------------------------------------------------
# Hardware / tiling helpers
# --------------------------------------------------------------------------
def _vmem_capacity_bytes():
    """Physical VMEM per TensorCore; conservative fallback if the query fails."""
    try:
        cap = int(pltpu.get_tpu_info().vmem_capacity_bytes)
        if cap > 0:
            return cap
    except Exception:
        pass
    return 64 * MIB  # v7x per-TC VMEM (smallest across v5e/v6e/v7x)


def _pick_l_tile(C, L, itemsize, target_bytes):
    """Largest lane-dense (multiple-of-128) L tile within the block budget."""
    if L <= LANE:
        return L  # full-extent L block (== array dim, exempt from 128 rule)
    tl = LANE
    while tl * 2 <= L and tl * 2 <= 4096 and C * tl * 2 * itemsize <= target_bytes:
        tl *= 2
    return tl


def _pick_batch_tile(B, row_bytes, budget_bytes):
    """Largest divisor of B fitting the budget, keeping >= 2 batch tiles when
    B >= 2 so the 'parallel' grid axis can be sharded across v7x's 2 cores."""
    tb = 1
    for cand in range(B, 0, -1):
        if B % cand:
            continue
        if cand * row_bytes > budget_bytes:
            continue
        if B >= 2 and B // cand < 2:
            continue
        tb = cand
        break
    return tb


# --------------------------------------------------------------------------
# Shared gate math (layout-safe ops only)
# --------------------------------------------------------------------------
def _gate_from_sums(sums3, w1, w2, inv_len):
    """sums3: (tb, C, 1) f32 per-(b,c) sums -> (tb, C, 1) f32 sigmoid gate."""
    tb = sums3.shape[0]
    y = jnp.swapaxes(sums3 * inv_len, 1, 2)                      # (tb, 1, C) mean
    w1b = jnp.broadcast_to(w1.astype(jnp.float32)[None], (tb,) + w1.shape)
    w2b = jnp.broadcast_to(w2.astype(jnp.float32)[None], (tb,) + w2.shape)
    h = jnp.einsum("bic,bch->bih", y, w1b,
                   preferred_element_type=jnp.float32)           # (tb, 1, H)
    h = jnp.maximum(h, 0.0)
    s = jnp.einsum("bih,bhc->bic", h, w2b,
                   preferred_element_type=jnp.float32)           # (tb, 1, C)
    return jnp.swapaxes(jax.nn.sigmoid(s), 1, 2)                 # (tb, C, 1)


# --------------------------------------------------------------------------
# Kernels
# --------------------------------------------------------------------------
def _fused_kernel(x_ref, w1_ref, w2_ref, o_ref, *, inv_len):
    """Single pass: whole-L slab -> sum -> gate MLP -> scale (1 read, 1 write)."""
    x = x_ref[...]
    sums = jnp.sum(x.astype(jnp.float32), axis=-1, keepdims=True)  # (tb, C, 1)
    gate = _gate_from_sums(sums, w1_ref[...], w2_ref[...], inv_len)
    o_ref[...] = x * gate.astype(x.dtype)


def _reduce_kernel(x_ref, sum_ref, *, true_len, tl, ragged):
    """Pass 1: accumulate per-(b, c) sums over L. Grid: (batch tiles, L tiles)."""
    l = pl.program_id(1)

    @pl.when(l == 0)
    def _():
        sum_ref[...] = jnp.zeros_like(sum_ref)

    x = x_ref[...].astype(jnp.float32)
    if ragged:  # mask the OOB tail of the last (partial) L tile
        pos = l * tl + jax.lax.broadcasted_iota(jnp.int32, x.shape, 2)
        x = jnp.where(pos < true_len, x, 0.0)
    sum_ref[...] += jnp.sum(x, axis=-1, keepdims=True)


def _scale_kernel(sum_ref, w1_ref, w2_ref, x_ref, o_ref, gate_ref, *, inv_len):
    """Pass 2: gate MLP once per batch tile (l == 0) into scratch, then scale."""
    @pl.when(pl.program_id(1) == 0)
    def _():
        gate_ref[...] = _gate_from_sums(
            sum_ref[...].astype(jnp.float32), w1_ref[...], w2_ref[...], inv_len)

    o_ref[...] = x_ref[...] * gate_ref[...].astype(x_ref.dtype)


# --------------------------------------------------------------------------
# Wrapper
# --------------------------------------------------------------------------
def se_module(x, w1_t, w2_t, *, force_two_pass=False):
    """x: (B, C, L); w1_t: (C, C//r); w2_t: (C//r, C). Returns x * SE gate."""
    B, C, L = x.shape
    H = w1_t.shape[1]
    itemsize = jnp.dtype(x.dtype).itemsize
    inv_len = 1.0 / L

    vmem_cap = _vmem_capacity_bytes()
    vmem_ceiling = max(vmem_cap - 16 * MIB, vmem_cap // 2)  # Mosaic headroom
    weight_bytes = 2 * C * H * 4

    # ---------------- fused single pass (1 read + 1 write of x) ------------
    fused_budget = vmem_cap // 2            # in+out double-buffered slabs
    row_bytes = C * L * itemsize
    if not force_two_pass and 4 * row_bytes + weight_bytes <= fused_budget:
        tb = _pick_batch_tile(B, row_bytes, (fused_budget - weight_bytes) // 4)
        nb = B // tb
        buf_bytes = 4 * tb * row_bytes + weight_bytes
        vmem_limit = int(min(vmem_ceiling, max(32 * MIB, buf_bytes + 8 * MIB)))
        return pl.pallas_call(
            partial(_fused_kernel, inv_len=inv_len),
            out_shape=jax.ShapeDtypeStruct((B, C, L), x.dtype),
            grid_spec=pltpu.PrefetchScalarGridSpec(
                num_scalar_prefetch=0,
                grid=(nb,),
                in_specs=[
                    pl.BlockSpec((tb, C, L), lambda b: (b, 0, 0)),
                    pl.BlockSpec((C, H), lambda b: (0, 0)),
                    pl.BlockSpec((H, C), lambda b: (0, 0)),
                ],
                out_specs=pl.BlockSpec((tb, C, L), lambda b: (b, 0, 0)),
            ),
            compiler_params=pltpu.CompilerParams(
                dimension_semantics=("parallel",),
                vmem_limit_bytes=vmem_limit,
            ),
        )(x, w1_t, w2_t)

    # ---------------- two-pass streaming fallback ---------------------------
    target_bytes = min(8 * MIB, vmem_ceiling // 6)
    tl = _pick_l_tile(C, L, itemsize, target_bytes)
    tb = _pick_batch_tile(B, C * tl * itemsize, target_bytes)
    nb, nl = B // tb, pl.cdiv(L, tl)
    block_bytes = tb * C * tl * itemsize
    vmem_limit = int(min(vmem_ceiling, max(32 * MIB, 4 * block_bytes + 8 * MIB)))
    ragged = (L % tl) != 0

    # pass 1: streaming reduction over L -> per-(b, c) sums (resident accumulator)
    sums = pl.pallas_call(
        partial(_reduce_kernel, true_len=L, tl=tl, ragged=ragged),
        out_shape=jax.ShapeDtypeStruct((B, C, 1), jnp.float32),
        grid_spec=pltpu.PrefetchScalarGridSpec(
            num_scalar_prefetch=0,
            grid=(nb, nl),
            in_specs=[pl.BlockSpec((tb, C, tl), lambda b, l: (b, 0, l))],
            out_specs=pl.BlockSpec((tb, C, 1), lambda b, l: (b, 0, 0)),
        ),
        compiler_params=pltpu.CompilerParams(
            dimension_semantics=("parallel", "arbitrary"),
            vmem_limit_bytes=vmem_limit,
        ),
    )(x)

    # pass 2: stream x again, gate MLP folded in (computed once per batch tile)
    out = pl.pallas_call(
        partial(_scale_kernel, inv_len=inv_len),
        out_shape=jax.ShapeDtypeStruct((B, C, L), x.dtype),
        grid_spec=pltpu.PrefetchScalarGridSpec(
            num_scalar_prefetch=0,
            grid=(nb, nl),
            in_specs=[
                pl.BlockSpec((tb, C, 1), lambda b, l: (b, 0, 0)),
                pl.BlockSpec((C, H), lambda b, l: (0, 0)),
                pl.BlockSpec((H, C), lambda b, l: (0, 0)),
                pl.BlockSpec((tb, C, tl), lambda b, l: (b, 0, l)),
            ],
            out_specs=pl.BlockSpec((tb, C, tl), lambda b, l: (b, 0, l)),
            scratch_shapes=[pltpu.VMEM((tb, C, 1), jnp.float32)],
        ),
        compiler_params=pltpu.CompilerParams(
            dimension_semantics=("parallel", "arbitrary"),
            vmem_limit_bytes=vmem_limit,
        ),
    )(sums, w1_t, w2_t, x)
    return out


def se_reference(x, w1_t, w2_t):
    y = jnp.mean(x, axis=-1)                 # (B, C)
    h = jnp.maximum(y @ w1_t, 0.0)           # (B, H)
    s = jax.nn.sigmoid(h @ w2_t)             # (B, C)
    return x * s[:, :, None]


if __name__ == "__main__":
    B, C, reduction = 2, 16, 8
    H = C // reduction

    key = jax.random.PRNGKey(0)
    kx, k1, k2, kx2 = jax.random.split(key, 4)

    # PyTorch nn.Linear stores (out, in); pass the transposed (in, out) weights.
    w1 = jax.random.normal(k1, (H, C), dtype=jnp.float32) * (1.0 / np.sqrt(C))
    w2 = jax.random.normal(k2, (C, H), dtype=jnp.float32) * (1.0 / np.sqrt(H))
    w1_t, w2_t = w1.T, w2.T                  # (C, H), (H, C)

    # Fused single-pass path (default for small/medium C*L).
    L = 256
    x = jax.random.normal(kx, (B, C, L), dtype=jnp.float32)
    out = jax.block_until_ready(se_module(x, w1_t, w2_t))
    np.testing.assert_allclose(np.asarray(out),
                               np.asarray(se_reference(x, w1_t, w2_t)),
                               rtol=1e-5, atol=1e-5)

    # Two-pass streaming path with a ragged (non-multiple-of-128) L,
    # exercising the in-kernel mask / OOB-store-discard paths.
    L2 = 200
    x2 = jax.random.normal(kx2, (B, C, L2), dtype=jnp.float32)
    out2 = jax.block_until_ready(se_module(x2, w1_t, w2_t, force_two_pass=True))
    np.testing.assert_allclose(np.asarray(out2),
                               np.asarray(se_reference(x2, w1_t, w2_t)),
                               rtol=1e-5, atol=1e-5)

    print("KERNEL_OK")
</pallas_src>

<mosaic_0001>
module attributes {stable_mosaic.version = 11 : i64} {
  func.func @_fused_kernel(%arg0: i32, %arg1: memref<1x16x256xf32, #tpu.memory_space<vmem>>, %arg2: memref<16x2xf32, #tpu.memory_space<vmem>>, %arg3: memref<2x16xf32, #tpu.memory_space<vmem>>, %arg4: memref<1x16x256xf32, #tpu.memory_space<vmem>>) attributes {dimension_semantics = [#tpu.dimension_semantics<parallel>], iteration_bounds = array<i64: 2>, scalar_prefetch = 0 : i64, scratch_operands = 0 : i64, tpu.core_type = #tpu.core_type<tc>, window_params = [{transform_indices = @transform_0, window_bounds = array<i64: 1, 16, 256>}, {pipeline_mode = #tpu.pipeline_mode<synchronous>, transform_indices = @transform_1, window_bounds = array<i64: 16, 2>}, {pipeline_mode = #tpu.pipeline_mode<synchronous>, transform_indices = @transform_2, window_bounds = array<i64: 2, 16>}, {transform_indices = @transform_3, window_bounds = array<i64: 1, 16, 256>}]} {
    %c0 = arith.constant 0 : index
    %c0_0 = arith.constant 0 : index
    %c0_1 = arith.constant 0 : index
    %0 = vector.load %arg1[%c0, %c0_0, %c0_1] : memref<1x16x256xf32, #tpu.memory_space<vmem>>, vector<1x16x256xf32>
    %cst = arith.constant dense<0.000000e+00> : vector<1x16xf32>
    %1 = vector.multi_reduction <add>, %0, %cst [2] : vector<1x16x256xf32> to vector<1x16xf32>
    %2 = vector.shape_cast %1 : vector<1x16xf32> to vector<1x16x1xf32>
    %c0_2 = arith.constant 0 : index
    %c0_3 = arith.constant 0 : index
    %3 = vector.load %arg2[%c0_2, %c0_3] : memref<16x2xf32, #tpu.memory_space<vmem>>, vector<16x2xf32>
    %c0_4 = arith.constant 0 : index
    %c0_5 = arith.constant 0 : index
    %4 = vector.load %arg3[%c0_4, %c0_5] : memref<2x16xf32, #tpu.memory_space<vmem>>, vector<2x16xf32>
    %cst_6 = arith.constant 3.906250e-03 : f32
    %5 = vector.broadcast %cst_6 : f32 to vector<1x16x1xf32>
    %6 = arith.mulf %2, %5 : vector<1x16x1xf32>
    %7 = tpu.transpose %6, [0, 2, 1] : vector<1x16x1xf32> -> vector<1x1x16xf32>
    %8 = vector.shape_cast %3 : vector<16x2xf32> to vector<1x16x2xf32>
    %9 = vector.shape_cast %4 : vector<2x16xf32> to vector<1x2x16xf32>
    "tpu.trace_start"() <{level = 10 : i32, message = "bic,bch->bih"}> : () -> ()
    %cst_7 = arith.constant dense<0.000000e+00> : vector<1x1x2xf32>
    %10 = tpu.matmul %7, %8, %cst_7 {dimension_numbers = #tpu.dot_dimension_numbers<[2], [1], [1], [2], [0, 0, 0, 1, 1, 2], [0], [0]>} : vector<1x1x16xf32>, vector<1x16x2xf32>, vector<1x1x2xf32> -> vector<1x1x2xf32>
    "tpu.trace_stop"() : () -> ()
    %cst_8 = arith.constant 0.000000e+00 : f32
    %11 = vector.broadcast %cst_8 : f32 to vector<1x1x2xf32>
    %12 = arith.maximumf %10, %11 : vector<1x1x2xf32>
    "tpu.trace_start"() <{level = 10 : i32, message = "bih,bhc->bic"}> : () -> ()
    %cst_9 = arith.constant dense<0.000000e+00> : vector<1x1x16xf32>
    %13 = tpu.matmul %12, %9, %cst_9 {dimension_numbers = #tpu.dot_dimension_numbers<[2], [1], [1], [2], [0, 0, 0, 1, 1, 2], [0], [0]>} : vector<1x1x2xf32>, vector<1x2x16xf32>, vector<1x1x16xf32> -> vector<1x1x16xf32>
    "tpu.trace_stop"() : () -> ()
    %14 = arith.negf %13 : vector<1x1x16xf32>
    %15 = math.exp %14 : vector<1x1x16xf32>
    %cst_10 = arith.constant 1.000000e+00 : f32
    %16 = vector.broadcast %cst_10 : f32 to vector<1x1x16xf32>
    %17 = arith.addf %16, %15 : vector<1x1x16xf32>
    %18 = arith.divf %16, %17 : vector<1x1x16xf32>
    %19 = tpu.transpose %18, [0, 2, 1] : vector<1x1x16xf32> -> vector<1x16x1xf32>
    %20 = vector.broadcast %19 : vector<1x16x1xf32> to vector<1x16x256xf32>
    %21 = arith.mulf %0, %20 : vector<1x16x256xf32>
    %c0_11 = arith.constant 0 : index
    %c0_12 = arith.constant 0 : index
    %c0_13 = arith.constant 0 : index
    %22 = vector.load %arg4[%c0_11, %c0_12, %c0_13] : memref<1x16x256xf32, #tpu.memory_space<vmem>>, vector<1x16x256xf32>
    tpu.vector_store %arg4[%c0_11, %c0_12, %c0_13], %21 {strides = array<i32>} : memref<1x16x256xf32, #tpu.memory_space<vmem>>, vector<1x16x256xf32>,
    return
  }
  func.func @transform_0(%arg0: i32) -> (i32, i32, i32) {
    %c0_i32 = arith.constant 0 : i32
    %c0_i32_0 = arith.constant 0 : i32
    %c0_i32_1 = arith.constant 0 : i32
    return %arg0, %c0_i32, %c0_i32_0 : i32, i32, i32
  }
  func.func @transform_1(%arg0: i32) -> (i32, i32) {
    %c0_i32 = arith.constant 0 : i32
    %c0_i32_0 = arith.constant 0 : i32
    %c0_i32_1 = arith.constant 0 : i32
    return %c0_i32, %c0_i32_0 : i32, i32
  }
  func.func @transform_2(%arg0: i32) -> (i32, i32) {
    %c0_i32 = arith.constant 0 : i32
    %c0_i32_0 = arith.constant 0 : i32
    %c0_i32_1 = arith.constant 0 : i32
    return %c0_i32, %c0_i32_0 : i32, i32
  }
  func.func @transform_3(%arg0: i32) -> (i32, i32, i32) {
    %c0_i32 = arith.constant 0 : i32
    %c0_i32_0 = arith.constant 0 : i32
    %c0_i32_1 = arith.constant 0 : i32
    return %arg0, %c0_i32, %c0_i32_0 : i32, i32, i32
  }
}

</mosaic_0001>

<llo_original>
// kernel: tpu_custom_call.1
$region0: #{tpu_custom_call.1}
  #allocation0 [shape = 'u32[]', space=smem, size = 0x4, offset = 0x4, fixed_abs, tag = 'smem constant byte address 0x4 - core index']
  #allocation1 [shape = 'u32[144,128]{1,0:T(1,128)}', space=vmem, size = 0x12000, scoped, tag = 'internal scratch']
  %s0 = inlined_call_operand.hbm [shape: f32[2,16,256], index: 0, kind: input, shape index: {}]
  %s1 = inlined_call_operand.vmem [shape: f32[16,2], index: 1, kind: input, shape index: {}]
  %s2 = inlined_call_operand.vmem [shape: f32[2,16], index: 2, kind: input, shape index: {}]
  %s3 = inlined_call_operand.hbm [shape: f32[2,16,256], index: 3, kind: output, shape index: {}]
  %s4 = sld [smem:[#allocation0]]
  $region49: #{tpu_custom_call.1} parent=0
    _
  %s6 = ssub.s32 1, %s4
  %s7 = scalar_select 0, %s6, %s4
  $region1: #{tpu_custom_call.1} parent=0
    #allocation2 [shape = 'u8[32768]{0}', space=vmem, size = 0x8000, scoped, tag = 'input window, operand 0']
    #allocation3 [shape = 's32[2]{0}', space=sflag, size = 0x8, scoped, tag = 'scoped memory for tpu_custom_call.1']
    #allocation4 [shape = 's32[2]{0}', space=sflag, size = 0x8, scoped, tag = 'scoped memory for tpu_custom_call.1']
    #allocation5 [shape = 'u8[32768]{0}', space=vmem, size = 0x8000, scoped, tag = 'output window, operand 0']
    %8 = vsyncpa [#allocation3], 0
    %s9 = scalar_lea.sflag [#allocation3], 1
    %10 = vsyncpa %s9, 0
    %11 = vsyncpa [#allocation4], 0
    %s12 = scalar_lea.sflag [#allocation4], 1
    %13 = vsyncpa %s12, 0
    loop: start=0, step=1, limit=4
    $region2: #{tpu_custom_call.1} parent=1 // loop_pre_header
      _
    $region3: #{tpu_custom_call.1} parent=1 // loop_header
      %s15 = sphi 0, %s19
      %p16 = scmp.ge.s32.totalorder %s15, 4
      %s25 = sphi 0, %s27
      %s28 = sphi 0, %s25
      %s29 = sphi 0, %s28
      %s45 = sphi 0, %s29
      %s49 = sphi 0, %s49
      %s51 = sphi 0, %s49
      %s52 = sphi 0, %s51
      %s66 = sphi 0, %s52
      %s70 = sphi 0, %s70
      %s72 = sphi 0, %s70
      %s73 = sphi 0, %s72
      %s87 = sphi 0, %s73
      %s93 = sphi 0, %s95
      %s96 = sphi 0, %s93
      %s97 = sphi 0, %s96
      %s113 = sphi 0, %s97
    $region4: #{tpu_custom_call.1} parent=1 // loop_header_branch
      %18 = sbr.rel (%p16) target = $region8
    $region5: #{tpu_custom_call.1} parent=1 // loop_body
      %s20 = ssub.s32 %s15, 1
      %s21 = ssub.s32 %s15, 2
      %s22 = sadd.s32 %s15, 1
      %s23 = ssub.s32 %s15, %s22
      %p24 = scmp.eq.s32.totalorder %s23, 0
      %s26 = sadd.s32 %s25, 1
      %s27 = scalar_select %p24, %s25, %s26
      %p30 = pneg %p24
      %p31 = scmp.eq.s32.totalorder %s15, 1
      %p32 = por %p30, %p31
      %p33 = scmp.ne.s32.totalorder %s25, %s28
      %p34 = scmp.eq.s32.totalorder %s15, 0
      %p35 = por %p33, %p34
      %p36 = scmp.ne.s32.totalorder %s25, %s28
      %p37 = scmp.eq.s32.totalorder %s20, 1
      %p38 = por %p36, %p37
      %p39 = scmp.ne.s32.totalorder %s28, %s29
      %p40 = scmp.eq.s32.totalorder %s20, 0
      %p41 = por %p39, %p40
      %p42 = scmp.ne.s32.totalorder %s28, %s29
      %p43 = scmp.eq.s32.totalorder %s21, 1
      %p44 = por %p42, %p43
      %p46 = scmp.ne.s32.totalorder %s29, %s45
      %p47 = scmp.eq.s32.totalorder %s21, 0
      %p48 = por %p46, %p47
      %s50 = sadd.s32 %s49, 1
      %p53 = scmp.eq.s32.totalorder %s15, 1
      %p54 = scmp.ne.s32.totalorder %s49, %s51
      %p55 = scmp.eq.s32.totalorder %s15, 0
      %p56 = por %p54, %p55
      %p57 = scmp.ne.s32.totalorder %s49, %s51
      %p58 = scmp.eq.s32.totalorder %s20, 1
      %p59 = por %p57, %p58
      %p60 = scmp.ne.s32.totalorder %s51, %s52
      %p61 = scmp.eq.s32.totalorder %s20, 0
      %p62 = por %p60, %p61
      %p63 = scmp.ne.s32.totalorder %s51, %s52
      %p64 = scmp.eq.s32.totalorder %s21, 1
      %p65 = por %p63, %p64
      %p67 = scmp.ne.s32.totalorder %s52, %s66
      %p68 = scmp.eq.s32.totalorder %s21, 0
      %p69 = por %p67, %p68
      %s71 = sadd.s32 %s70, 1
      %p74 = scmp.eq.s32.totalorder %s15, 1
      %p75 = scmp.ne.s32.totalorder %s70, %s72
      %p76 = scmp.eq.s32.totalorder %s15, 0
      %p77 = por %p75, %p76
      %p78 = scmp.ne.s32.totalorder %s70, %s72
      %p79 = scmp.eq.s32.totalorder %s20, 1
      %p80 = por %p78, %p79
      %p81 = scmp.ne.s32.totalorder %s72, %s73
      %p82 = scmp.eq.s32.totalorder %s20, 0
      %p83 = por %p81, %p82
      %p84 = scmp.ne.s32.totalorder %s72, %s73
      %p85 = scmp.eq.s32.totalorder %s21, 1
      %p86 = por %p84, %p85
      %p88 = scmp.ne.s32.totalorder %s73, %s87
      %p89 = scmp.eq.s32.totalorder %s21, 0
      %p90 = por %p88, %p89
      %s91 = ssub.s32 %s15, %s22
      %p92 = scmp.eq.s32.totalorder %s91, 0
      %s94 = sadd.s32 %s93, 1
      %s95 = scalar_select %p92, %s93, %s94
      %p98 = pneg %p92
      %p99 = scmp.eq.s32.totalorder %s15, 1
      %p100 = por %p98, %p99
      %p101 = scmp.ne.s32.totalorder %s93, %s96
      %p102 = scmp.eq.s32.totalorder %s15, 0
      %p103 = por %p101, %p102
      %p104 = scmp.ne.s32.totalorder %s93, %s96
      %p105 = scmp.eq.s32.totalorder %s20, 1
      %p106 = por %p104, %p105
      %p107 = scmp.ne.s32.totalorder %s96, %s97
      %p108 = scmp.eq.s32.totalorder %s20, 0
      %p109 = por %p107, %p108
      %p110 = scmp.ne.s32.totalorder %s96, %s97
      %p111 = scmp.eq.s32.totalorder %s21, 1
      %p112 = por %p110, %p111
      %p114 = scmp.ne.s32.totalorder %s97, %s113
      %p115 = scmp.eq.s32.totalorder %s21, 0
      %p116 = por %p114, %p115
      %p117 = scmp.le.s32.totalorder 1, %s15
      %p118 = scmp.lt.s32.totalorder %s15, 3
      %p119 = pnand %p117, %p118
      %p120 = pneg %p119
      // Predicated region
      $region9: #{tpu_custom_call.1} parent=5 // pred_check
        _
      $region10: #{tpu_custom_call.1} parent=5 // pred_check_branch
        %122 = sbr.rel (%p119) target = $region12
      $region11: #{tpu_custom_call.1} parent=5 // pred_region
        %s123 = ssub.s32 %s15, 1
        // Predicated region
        $region13: #{tpu_custom_call.1} parent=11 // pred_check
          %p124 = pneg %p62
        $region14: #{tpu_custom_call.1} parent=11 // pred_check_branch
          %126 = sbr.rel (%p124) target = $region16
        $region15: #{tpu_custom_call.1} parent=11 // pred_region
          _
        $region16: #{tpu_custom_call.1} parent=11 // pred_fallthru
          _
        // Predicated region
        $region17: #{tpu_custom_call.1} parent=11 // pred_check
          %p127 = pneg %p83
        $region18: #{tpu_custom_call.1} parent=11 // pred_check_branch
          %129 = sbr.rel (%p127) target = $region20
        $region19: #{tpu_custom_call.1} parent=11 // pred_region
          _
        $region20: #{tpu_custom_call.1} parent=11 // pred_fallthru
          _
      $region12: #{tpu_custom_call.1} parent=5 // pred_fallthru
        _
      %p130 = scmp.lt.s32.totalorder %s15, 2
      // Predicated region
      $region21: #{tpu_custom_call.1} parent=5 // pred_check
        %p131 = pneg %p130
      $region22: #{tpu_custom_call.1} parent=5 // pred_check_branch
        %133 = sbr.rel (%p131) target = $region24
      $region23: #{tpu_custom_call.1} parent=5 // pred_region
        // Predicated region
        $region25: #{tpu_custom_call.1} parent=23 // pred_check
          %p134 = pneg %p35
        $region26: #{tpu_custom_call.1} parent=23 // pred_check_branch
          %136 = sbr.rel (%p134) target = $region28
        $region27: #{tpu_custom_call.1} parent=23 // pred_region
          %s137 = sand.u32 %s25, 1
          %s138 = scalar_lea.sflag [#allocation3], %s137
          %s139 = sand.u32 %s25, 1
          %s140 = smul.addr %s139, 32
          %s141 = scalar_lea.vmem [#allocation2], %s140
          %s143 = ssub.s32 512, 512
          %144 = vsyncadd %s138, %s143
          %s145 = smul.addr %s15, 4
          %s146 = smul.addr %s145, 128
          %s147 = scalar_lea.hbm %s0, %s146
          %s148 = sshll.u32 %s141, 4
          %s149 = int_to_ptr.vmem [resolvable:$true] %s148
          %154 = dma.hbm_to_vmem [thread:$0]  %s147, 512, %s149, %s138, 256, 256, 16
        $region28: #{tpu_custom_call.1} parent=23 // pred_fallthru
          _
      $region24: #{tpu_custom_call.1} parent=5 // pred_fallthru
        _
      %p155 = scmp.le.s32.totalorder 1, %s15
      %p156 = scmp.lt.s32.totalorder %s15, 3
      %p157 = pnand %p155, %p156
      %p158 = pneg %p157
      // Predicated region
      $region29: #{tpu_custom_call.1} parent=5 // pred_check
        _
      $region30: #{tpu_custom_call.1} parent=5 // pred_check_branch
        %160 = sbr.rel (%p157) target = $region32
      $region31: #{tpu_custom_call.1} parent=5 // pred_region
        %s161 = ssub.s32 %s15, 1
        %s162 = sand.u32 %s28, 1
        %s163 = scalar_lea.sflag [#allocation3], %s162
        %s164 = sand.u32 %s28, 1
        %s165 = smul.addr %s164, 32
        %s166 = scalar_lea.vmem [#allocation2], %s165
        // Predicated region
        $region33: #{tpu_custom_call.1} parent=31 // pred_check
          %p167 = pneg %p41
        $region34: #{tpu_custom_call.1} parent=31 // pred_check_branch
          %169 = sbr.rel (%p167) target = $region36
        $region35: #{tpu_custom_call.1} parent=31 // pred_region
          %170 = dma.done %s163, 512
        $region36: #{tpu_custom_call.1} parent=31 // pred_fallthru
          _
        %s171 = sand.u32 %s28, 1
        %s172 = scalar_lea.sflag [#allocation3], %s171
        %s173 = sand.u32 %s28, 1
        %s174 = smul.addr %s173, 32
        %s175 = scalar_lea.vmem [#allocation2], %s174
        %p176 = pneg %p41
        %p177 = pneg %p38
        %p178 = pneg %p62
        %p179 = pneg %p59
        %p180 = pneg %p83
        %p181 = pneg %p80
        %p182 = pneg %p109
        %p183 = pneg %p106
        %s184 = sand.u32 %s96, 1
        %s185 = scalar_lea.sflag [#allocation4], %s184
        %s186 = sand.u32 %s96, 1
        %s187 = smul.addr %s186, 32
        %s188 = scalar_lea.vmem [#allocation5], %s187
        %v189 = vld [vmem:[%s166] sm:$0xff]
        %v190 = vld [vmem:[%s166 + $0x8] sm:$0xff]
        %v191 = vld [vmem:[%s166 + $0x10] sm:$0xff]
        %v192 = vld [vmem:[%s166 + $0x18] sm:$0xff]
        %v193 = vadd.f32 %v189, %v190
        %194 = vadd.xlane.f32.xlu0 %v193
        %v195 = vpop.xlane.xlu0 %194
        %v196 = vadd.f32 %v191, %v192
        %197 = vadd.xlane.f32.xlu0 %v196
        %v198 = vpop.xlane.xlu0 %197
        %v199 = vld [vmem:[%s1] sm:$0xff]
        %v200 = vld [vmem:[%s1 + $0x8] sm:$0xff]
        %v201 = vld [vmem:[%s2] sm:$0x3]
        %v202 = vmul.f32 %v195, 0.00390625
        %v203 = vmul.f32 %v198, 0.00390625
        %204 = vxpose.xlu0.b32.start [1/16] %v202, 128
        %205 = vxpose.xlu0.b32.cont [2/16] %v203, 128
        %206 = vxpose.xlu0.b32.cont [3/16] 0.0, 128
        %207 = vxpose.xlu0.b32.cont [4/16] 0.0, 128
        %208 = vxpose.xlu0.b32.cont [5/16] 0.0, 128
        %209 = vxpose.xlu0.b32.cont [6/16] 0.0, 128
        %210 = vxpose.xlu0.b32.cont [7/16] 0.0, 128
        %211 = vxpose.xlu0.b32.cont [8/16] 0.0, 128
        %212 = vxpose.xlu0.b32.cont [9/16] 0.0, 128
        %213 = vxpose.xlu0.b32.cont [10/16] 0.0, 128
        %214 = vxpose.xlu0.b32.cont [11/16] 0.0, 128
        %215 = vxpose.xlu0.b32.cont [12/16] 0.0, 128
        %216 = vxpose.xlu0.b32.cont [13/16] 0.0, 128
        %217 = vxpose.xlu0.b32.cont [14/16] 0.0, 128
        %218 = vxpose.xlu0.b32.cont [15/16] 0.0, 128
        %219 = vxpose.xlu0.b32.end [16/16] 0.0, 128
        %v220 = vpop.trf.xlu0
        %v221 = vpop.trf.xlu0
        %v222 = vpop.trf.xlu0
        %v223 = vpop.trf.xlu0
        %v224 = vpop.trf.xlu0
        %v225 = vpop.trf.xlu0
        %v226 = vpop.trf.xlu0
        %v227 = vpop.trf.xlu0
        %v228 = vpop.trf.xlu0
        %v229 = vpop.trf.xlu0
        %v230 = vpop.trf.xlu0
        %v231 = vpop.trf.xlu0
        %v232 = vpop.trf.xlu0
        %v233 = vpop.trf.xlu0
        %v234 = vpop.trf.xlu0
        %v235 = vpop.trf.xlu0
        %vm236 = vcmask 130048
        %v238 = vsel %vm236, %v220, 0
        %240 = vmatprep.subr.mxu0 0.0
        %241 = vmatpush1.msra.mxu0 0.0
        %242 = vmatprep.subr.mxu0 0.0
        %243 = vmatpush1.msra.mxu0 0.0
        %244 = vmatprep.subr.mxu0 0.0
        %245 = vmatpush1.msra.mxu0 0.0
        %246 = vmatprep.subr.mxu0 0.0
        %247 = vmatpush1.msra.mxu0 0.0
        %248 = vmatprep.subr.mxu0 0.0
        %249 = vmatpush1.msra.mxu0 0.0
        %250 = vmatprep.subr.mxu0 0.0
        %251 = vmatpush1.msra.mxu0 0.0
        %252 = vmatprep.subr.mxu0 0.0
        %253 = vmatpush1.msra.mxu0 0.0
        %254 = vmatprep.subr.mxu0 0.0
        %255 = vmatpush1.msra.mxu0 0.0
        %256 = vmatprep.subr.mxu0 0.0
        %257 = vmatpush1.msra.mxu0 0.0
        %258 = vmatprep.subr.mxu0 0.0
        %259 = vmatpush1.msra.mxu0 0.0
        %260 = vmatprep.subr.mxu0 0.0
        %261 = vmatpush1.msra.mxu0 0.0
        %262 = vmatprep.subr.mxu0 0.0
        %263 = vmatpush1.msra.mxu0 0.0
        %264 = vmatprep.subr.mxu0 0.0
        %265 = vmatpush1.msra.mxu0 0.0
        %266 = vmatprep.subr.mxu0 0.0
        %267 = vmatpush1.msra.mxu0 0.0
        %268 = vmatprep.subr.mxu0 0.0
        %269 = vmatpush1.msra.mxu0 %v200
        %270 = vmatprep.subr.mxu0 0.0
        %271 = vmatpush1.msra.mxu0 %v199
        %272 = vmatprep.subr.mxu0 0.0
        %273 = vmatpush2.msra.mxu0 0.0
        %274 = vmatprep.subr.mxu0 0.0
        %275 = vmatpush2.msra.mxu0 0.0
        %276 = vmatprep.subr.mxu0 0.0
        %277 = vmatpush2.msra.mxu0 0.0
        %278 = vmatprep.subr.mxu0 0.0
        %279 = vmatpush2.msra.mxu0 0.0
        %280 = vmatprep.subr.mxu0 0.0
        %281 = vmatpush2.msra.mxu0 0.0
        %282 = vmatprep.subr.mxu0 0.0
        %283 = vmatpush2.msra.mxu0 0.0
        %284 = vmatprep.subr.mxu0 0.0
        %285 = vmatpush2.msra.mxu0 0.0
        %286 = vmatprep.subr.mxu0 0.0
        %287 = vmatpush2.msra.mxu0 0.0
        %288 = vmatprep.subr.mxu0 0.0
        %289 = vmatpush2.msra.mxu0 0.0
        %290 = vmatprep.subr.mxu0 0.0
        %291 = vmatpush2.msra.mxu0 0.0
        %292 = vmatprep.subr.mxu0 0.0
        %293 = vmatpush2.msra.mxu0 0.0
        %294 = vmatprep.subr.mxu0 0.0
        %295 = vmatpush2.msra.mxu0 0.0
        %296 = vmatprep.subr.mxu0 0.0
        %297 = vmatpush2.msra.mxu0 0.0
        %298 = vmatprep.subr.mxu0 0.0
        %299 = vmatpush2.msra.mxu0 0.0
        %300 = vmatprep.subr.mxu0 0.0
        %301 = vmatpush2.msra.mxu0 0.0
        %302 = vmatprep.subr.mxu0 0.0
        %303 = vmatpush2.msra.mxu0 0.0
        %304 = vmatprep.mubr.f32.mxu0 0.0
        %305 = vmatmul.mubr.f32.gmra.mxu0 %v238
        %v306 = vpop.f32.mrf.mxu0
        %v307 = vadd.f32 0.0, %v306
        %v308 = vpop.f32.mrf.mxu0
        %309 = vdwg.mxu0
        %v310 = vmax.f32 %v307, 0.0
        %vm311 = vcmask 15360
        %v313 = vsel %vm311, %v310, 0
        %vm315 = vcmask 1041408
        %v317 = vsel %vm315, %v201, 0
        %319 = vmatprep.subr.mxu0 0.0
        %320 = vmatpush1.msra.mxu0 0.0
        %321 = vmatprep.subr.mxu0 0.0
        %322 = vmatpush1.msra.mxu0 0.0
        %323 = vmatprep.subr.mxu0 0.0
        %324 = vmatpush1.msra.mxu0 0.0
        %325 = vmatprep.subr.mxu0 0.0
        %326 = vmatpush1.msra.mxu0 0.0
        %327 = vmatprep.subr.mxu0 0.0
        %328 = vmatpush1.msra.mxu0 0.0
        %329 = vmatprep.subr.mxu0 0.0
        %330 = vmatpush1.msra.mxu0 0.0
        %331 = vmatprep.subr.mxu0 0.0
        %332 = vmatpush1.msra.mxu0 0.0
        %333 = vmatprep.subr.mxu0 0.0
        %334 = vmatpush1.msra.mxu0 0.0
        %335 = vmatprep.subr.mxu0 0.0
        %336 = vmatpush1.msra.mxu0 0.0
        %337 = vmatprep.subr.mxu0 0.0
        %338 = vmatpush1.msra.mxu0 0.0
        %339 = vmatprep.subr.mxu0 0.0
        %340 = vmatpush1.msra.mxu0 0.0
        %341 = vmatprep.subr.mxu0 0.0
        %342 = vmatpush1.msra.mxu0 0.0
        %343 = vmatprep.subr.mxu0 0.0
        %344 = vmatpush1.msra.mxu0 0.0
        %345 = vmatprep.subr.mxu0 0.0
        %346 = vmatpush1.msra.mxu0 0.0
        %347 = vmatprep.subr.mxu0 0.0
        %348 = vmatpush1.msra.mxu0 0.0
        %349 = vmatprep.subr.mxu0 0.0
        %350 = vmatpush1.msra.mxu0 %v317
        %351 = vmatprep.subr.mxu0 0.0
        %352 = vmatpush2.msra.mxu0 0.0
        %353 = vmatprep.subr.mxu0 0.0
        %354 = vmatpush2.msra.mxu0 0.0
        %355 = vmatprep.subr.mxu0 0.0
        %356 = vmatpush2.msra.mxu0 0.0
        %357 = vmatprep.subr.mxu0 0.0
        %358 = vmatpush2.msra.mxu0 0.0
        %359 = vmatprep.subr.mxu0 0.0
        %360 = vmatpush2.msra.mxu0 0.0
        %361 = vmatprep.subr.mxu0 0.0
        %362 = vmatpush2.msra.mxu0 0.0
        %363 = vmatprep.subr.mxu0 0.0
        %364 = vmatpush2.msra.mxu0 0.0
        %365 = vmatprep.subr.mxu0 0.0
        %366 = vmatpush2.msra.mxu0 0.0
        %367 = vmatprep.subr.mxu0 0.0
        %368 = vmatpush2.msra.mxu0 0.0
        %369 = vmatprep.subr.mxu0 0.0
        %370 = vmatpush2.msra.mxu0 0.0
        %371 = vmatprep.subr.mxu0 0.0
        %372 = vmatpush2.msra.mxu0 0.0
        %373 = vmatprep.subr.mxu0 0.0
        %374 = vmatpush2.msra.mxu0 0.0
        %375 = vmatprep.subr.mxu0 0.0
        %376 = vmatpush2.msra.mxu0 0.0
        %377 = vmatprep.subr.mxu0 0.0
        %378 = vmatpush2.msra.mxu0 0.0
        %379 = vmatprep.subr.mxu0 0.0
        %380 = vmatpush2.msra.mxu0 0.0
        %381 = vmatprep.subr.mxu0 0.0
        %382 = vmatpush2.msra.mxu0 0.0
        %383 = vmatprep.mubr.f32.mxu0 0.0
        %384 = vmatmul.mubr.f32.gmra.mxu0 %v313
        %v385 = vpop.f32.mrf.mxu0
        %v386 = vadd.f32 0.0, %v385
        %v387 = vpop.f32.mrf.mxu0
        %388 = vdwg.mxu0
        %v389 = vxor.u32 %v386, 2147483648
        %v390 = vmul.f32 %v389, 1.442695
        %v391 = vpow.pop %v390
        %v392 = vadd.f32 %v391, 1.0
        %v393 = vrcp.pop %v392
        %v394 = vmul.f32 1.0, %v393
        %395 = vxpose.xlu0.b32.start [1/16] %v394, 128
        %396 = vxpose.xlu0.b32.cont [2/16] 0.0, 128
        %397 = vxpose.xlu0.b32.cont [3/16] 0.0, 128
        %398 = vxpose.xlu0.b32.cont [4/16] 0.0, 128
        %399 = vxpose.xlu0.b32.cont [5/16] 0.0, 128
        %400 = vxpose.xlu0.b32.cont [6/16] 0.0, 128
        %401 = vxpose.xlu0.b32.cont [7/16] 0.0, 128
        %402 = vxpose.xlu0.b32.cont [8/16] 0.0, 128
        %403 = vxpose.xlu0.b32.cont [9/16] 0.0, 128
        %404 = vxpose.xlu0.b32.cont [10/16] 0.0, 128
        %405 = vxpose.xlu0.b32.cont [11/16] 0.0, 128
        %406 = vxpose.xlu0.b32.cont [12/16] 0.0, 128
        %407 = vxpose.xlu0.b32.cont [13/16] 0.0, 128
        %408 = vxpose.xlu0.b32.cont [14/16] 0.0, 128
        %409 = vxpose.xlu0.b32.cont [15/16] 0.0, 128
        %410 = vxpose.xlu0.b32.end [16/16] 0.0, 128
        %v411 = vpop.trf.xlu0
        %v412 = vpop.trf.xlu0
        %v413 = vpop.trf.xlu0
        %v414 = vpop.trf.xlu0
        %v415 = vpop.trf.xlu0
        %v416 = vpop.trf.xlu0
        %v417 = vpop.trf.xlu0
        %v418 = vpop.trf.xlu0
        %v419 = vpop.trf.xlu0
        %v420 = vpop.trf.xlu0
        %v421 = vpop.trf.xlu0
        %v422 = vpop.trf.xlu0
        %v423 = vpop.trf.xlu0
        %v424 = vpop.trf.xlu0
        %v425 = vpop.trf.xlu0
        %v426 = vpop.trf.xlu0
        %428 = vset.pattern.permute.xlu0 0
        %429 = vperm.xlu0 %428, %v411
        %v430 = vpop.permute.xlu0 %429
        %433 = vset.pattern.permute.xlu0 0
        %434 = vperm.xlu0 %433, %v412
        %v435 = vpop.permute.xlu0 %434
        %v437 = vmul.f32 %v189, %v430
        %v438 = vmul.f32 %v190, %v430
        %v439 = vmul.f32 %v191, %v435
        %v440 = vmul.f32 %v192, %v435
        %441 = vst [vmem:[%s188] sm:$0xff] %v437
        %442 = vst [vmem:[%s188 + $0x8] sm:$0xff] %v438
        %443 = vst [vmem:[%s188 + $0x10] sm:$0xff] %v439
        %444 = vst [vmem:[%s188 + $0x18] sm:$0xff] %v440
        %s445 = sand.u32 %s96, 1
        %s446 = scalar_lea.sflag [#allocation4], %s445
        %s447 = sand.u32 %s96, 1
        %s448 = smul.addr %s447, 32
        %s449 = scalar_lea.vmem [#allocation5], %s448
        // Predicated region
        $region37: #{tpu_custom_call.1} parent=31 // pred_check
          %p450 = pneg %p106
        $region38: #{tpu_custom_call.1} parent=31 // pred_check_branch
          %452 = sbr.rel (%p450) target = $region40
        $region39: #{tpu_custom_call.1} parent=31 // pred_region
          %s454 = ssub.s32 512, 512
          %455 = vsyncadd %s446, %s454
          %s456 = smul.addr %s20, 4
          %s457 = smul.addr %s456, 128
          %s458 = scalar_lea.hbm %s3, %s457
          %s459 = sshll.u32 %s449, 4
          %s460 = int_to_ptr.vmem [resolvable:$true] %s459
          %465 = dma.vmem_to_hbm [thread:$0]  %s460, 512, %s458, %s446, 256, 256, 16
        $region40: #{tpu_custom_call.1} parent=31 // pred_fallthru
          _
      $region32: #{tpu_custom_call.1} parent=5 // pred_fallthru
        _
      %p466 = scmp.le.s32.totalorder 2, %s15
      // Predicated region
      $region41: #{tpu_custom_call.1} parent=5 // pred_check
        %p467 = pneg %p466
      $region42: #{tpu_custom_call.1} parent=5 // pred_check_branch
        %469 = sbr.rel (%p467) target = $region44
      $region43: #{tpu_custom_call.1} parent=5 // pred_region
        %s470 = ssub.s32 %s15, 2
        // Predicated region
        $region45: #{tpu_custom_call.1} parent=43 // pred_check
          %p471 = pneg %p112
        $region46: #{tpu_custom_call.1} parent=43 // pred_check_branch
          %473 = sbr.rel (%p471) target = $region48
        $region47: #{tpu_custom_call.1} parent=43 // pred_region
          %s474 = sand.u32 %s97, 1
          %s475 = scalar_lea.sflag [#allocation4], %s474
          %s476 = sand.u32 %s97, 1
          %s477 = smul.addr %s476, 32
          %s478 = scalar_lea.vmem [#allocation5], %s477
          %479 = dma.done %s475, 512
        $region48: #{tpu_custom_call.1} parent=43 // pred_fallthru
          _
      $region44: #{tpu_custom_call.1} parent=5 // pred_fallthru
        _
    $region6: #{tpu_custom_call.1} parent=1 // loop_footer
      %s19 = sadd.s32 1, %s15
    $region7: #{tpu_custom_call.1} parent=1 // loop_footer_branch
      %14 = sbr.rel target = $region3
    $region8: #{tpu_custom_call.1} parent=1 // loop_exit
      _
    %480 = vsyncpa [#allocation3], 1
    %s481 = scalar_lea.sflag [#allocation3], 1
    %482 = vsyncpa %s481, 1
    %483 = vsyncpa [#allocation4], 1
    %s484 = scalar_lea.sflag [#allocation4], 1
    %485 = vsyncpa %s484, 1

</llo_original>
